<compile_context>
chip_gen: v6e
topology: v6e:2x2x1
jax: 0.10.0
libtpu: 0.0.40
codegen_flags: <defaults>
</compile_context>

<pallas_src>
import functools
import math

import jax
import jax.numpy as jnp
from jax import lax
from jax.experimental import pallas as pl
from jax.experimental.pallas import tpu as pltpu

_F32 = jnp.float32
_BF16 = jnp.bfloat16
_LANE = 128
_SUB = 16            # bf16 packs two rows per sublane -> keep row tiles multiples of 16
_EPS = 1e-3          # BasicConv2d uses BatchNorm2d(eps=0.001)


def _round_up(x, m):
    return ((x + m - 1) // m) * m


def _pair(v):
    return (v, v) if isinstance(v, int) else tuple(v)


def _vmem_limit_bytes():
    """Generation-aware VMEM budget: ~48 MiB on v7x (64 MiB VMEM), 96 MiB on v5e/v6e."""
    cap = 128 * 1024 * 1024
    try:
        cap = int(getattr(pltpu.get_tpu_info(), "vmem_capacity_bytes", cap))
    except Exception:
        pass
    return int(min(cap * 3 // 4, 96 * 1024 * 1024))


_VMEM_LIMIT = _vmem_limit_bytes()


def _device_kind():
    try:
        return jax.devices()[0].device_kind.lower()
    except Exception:
        return ""


_KIND = _device_kind()
_IS_V5E = ("v5e" in _KIND) or ("v5 lite" in _KIND) or ("v5litepod" in _KIND)
# Chips whose "parallel" grid axes are sharded across 2 TensorCores (v4/v5p megacore, v7x).
_TWO_TC = ("v7" in _KIND) or (("v4" in _KIND) and "lite" not in _KIND) or ("v5p" in _KIND)


# ---------------------------------------------------------------------------
# Pallas kernels
# ---------------------------------------------------------------------------
def _gemm_bn_relu_kernel(a_ref, b_ref, sb_ref, o_ref):
    # relu((A @ B) * scale + bias) — conv-as-GEMM with folded BatchNorm + ReLU.
    # A and B are bf16 (f32 accumulation on the MXU); affine + ReLU in f32; bf16 store.
    acc = jnp.dot(a_ref[...], b_ref[...], preferred_element_type=jnp.float32)
    y = jnp.maximum(acc * sb_ref[0:1, :] + sb_ref[1:2, :], 0.0)
    o_ref[...] = y.astype(o_ref.dtype)


def _fc_softmax_kernel(x_ref, w_ref, b_ref, o_ref):
    # logits = x @ W + b ; softmax over the class (last) axis. Logits stay f32 so the
    # -1e30 padded-class bias zeroes padded classes exactly.
    logits = jnp.dot(x_ref[...].astype(_BF16), w_ref[...],
                     preferred_element_type=jnp.float32) + b_ref[...]
    m = jnp.max(logits, axis=-1, keepdims=True)
    e = jnp.exp(logits - m)
    o_ref[...] = e / jnp.sum(e, axis=-1, keepdims=True)


def _inception_e_1x1_kernel(x_ref, stem_w_ref, stem_sb_ref,
                            w2a_ref, sb2a_ref, w2b_ref, sb2b_ref,
                            wd2_ref, sbd2_ref,
                            wd3a_ref, sbd3a_ref, wd3b_ref, sbd3b_ref,
                            wp_ref, sbp_ref, o_ref, *, splits, n_pool):
    # Whole InceptionE block when the feature map is 1x1: every padded kxk conv only
    # uses its center tap, so each conv is a plain GEMM. All weights + intermediates
    # live in VMEM; the branch concat happens in-register and is stored once.
    def conv(a, w_ref, sb_ref, n=None):
        acc = jnp.dot(a, w_ref[...], preferred_element_type=jnp.float32)
        y = jnp.maximum(acc * sb_ref[0:1, :] + sb_ref[1:2, :], 0.0)
        return y if n is None else y[:, :n]

    n1, n3, nd = splits
    x = x_ref[...]                                        # (Mp, Cin) bf16
    stem = conv(x, stem_w_ref, stem_sb_ref)               # fused [b1 | b3_1 | bd_1]
    b1 = stem[:, :n1]
    b3_1 = stem[:, n1:n1 + n3].astype(_BF16)
    bd_1 = stem[:, n1 + n3:n1 + n3 + nd].astype(_BF16)
    b3a = conv(b3_1, w2a_ref, sb2a_ref)
    b3b = conv(b3_1, w2b_ref, sb2b_ref)
    bd_2 = conv(bd_1, wd2_ref, sbd2_ref).astype(_BF16)
    bd3a = conv(bd_2, wd3a_ref, sbd3a_ref)
    bd3b = conv(bd_2, wd3b_ref, sbd3b_ref)
    # avg_pool2d(3,1,1) on a 1x1 map (count_include_pad) = x/9; the /9 is folded into
    # branch_pool's BN scale, so the pool branch input is literally x.
    bp = conv(x, wp_ref, sbp_ref, n_pool)
    out = jnp.concatenate([b1, b3a, b3b, bd3a, bd3b, bp], axis=-1)
    o_ref[...] = out.astype(o_ref.dtype)


# ---------------------------------------------------------------------------
# Tiling heuristics + GEMM wrapper
# ---------------------------------------------------------------------------
def _choose_tm(M):
    # Tiny/medium M: one exact 16-aligned tile (no padding batch-2 tail layers to 128).
    if M <= 1024:
        return _round_up(max(M, _SUB), _SUB)
    return 256 if M < 4096 else 512


def _choose_tn(Np, m_tiles):
    if Np <= _LANE:
        return _LANE
    if _IS_V5E:                       # v5e MXU is 4x(128x128): 256-wide buys nothing
        return _LANE
    if Np % 256 == 0:
        # On 2-TC chips, avoid degenerate (1,1) grids: split Np=256 into two j-steps.
        if _TWO_TC and m_tiles == 1 and Np == 256:
            return _LANE
        return 256
    return _LANE


def _weight_spec(Kp, TN, buffered):
    if buffered and hasattr(pl, "Buffered"):
        try:
            # Weight-streaming regime: deepen the B pipeline so the DMA stream is never
            # exposed behind the (trivial) tiny-M compute.
            return pl.BlockSpec((Kp, TN), lambda i, j: (0, j),
                                pipeline_mode=pl.Buffered(3))
        except Exception:
            pass
    return pl.BlockSpec((Kp, TN), lambda i, j: (0, j))


@functools.lru_cache(maxsize=None)
def _make_gemm_bn_relu(Mp, Kp, Np, TM, TN, buffered):
    return pl.pallas_call(
        _gemm_bn_relu_kernel,
        out_shape=jax.ShapeDtypeStruct((Mp, Np), _BF16),
        grid=(Mp // TM, Np // TN),
        in_specs=[
            pl.BlockSpec((TM, Kp), lambda i, j: (i, 0)),
            _weight_spec(Kp, TN, buffered),
            pl.BlockSpec((2, TN), lambda i, j: (0, j)),
        ],
        out_specs=pl.BlockSpec((TM, TN), lambda i, j: (i, j)),
        compiler_params=pltpu.CompilerParams(
            dimension_semantics=("parallel", "parallel"),
            vmem_limit_bytes=_VMEM_LIMIT,
        ),
    )


def gemm_bn_relu(a, w_p, sb_p, n_out):
    """relu((a @ w) * scale + bias). w_p/(scale,bias) are pre-padded to (Kp, Np)/(2, Np)."""
    M, K = a.shape
    Kp, Np = w_p.shape
    a = a.astype(_BF16)                       # bf16 A blocks: half the HBM bytes
    TM = _choose_tm(M)
    Mp = _round_up(M, TM)
    if Mp > M or Kp > K:
        a = jnp.pad(a, ((0, Mp - M), (0, Kp - K)))
    m_tiles = Mp // TM
    TN = _choose_tn(Np, m_tiles)
    n_tiles = Np // TN
    buffered = bool(m_tiles == 1 and n_tiles >= 3)
    out = _make_gemm_bn_relu(Mp, Kp, Np, TM, TN, buffered)(a, w_p, sb_p)
    return out[:M, :n_out]


def fc_softmax(feat, w_p, b_p, num_classes):
    """Linear(2048, num_classes) followed by Softmax(dim=1), fused in one kernel."""
    B, F = feat.shape
    Fp, Np = w_p.shape
    assert F == Fp
    Bp = _round_up(max(B, 8), 8)
    if Bp > B:
        feat = jnp.pad(feat, ((0, Bp - B), (0, 0)))
    out = pl.pallas_call(
        _fc_softmax_kernel,
        out_shape=jax.ShapeDtypeStruct((Bp, Np), _F32),
        compiler_params=pltpu.CompilerParams(vmem_limit_bytes=_VMEM_LIMIT),
    )(feat, w_p, b_p)
    return out[:B, :num_classes]


# ---------------------------------------------------------------------------
# Glue: im2col (bf16, no lane-width K blow-up), pooling
# ---------------------------------------------------------------------------
def _im2col(x, kh, kw, sh, sw, ph, pw):
    """x: NHWC bf16 -> (N*Ho*Wo, kh*kw*C) patch matrix (row order matches HWIO weights)."""
    if ph or pw:
        x = jnp.pad(x, ((0, 0), (ph, ph), (pw, pw), (0, 0)))
    n, h, w, c = x.shape
    ho = (h - kh) // sh + 1
    wo = (w - kw) // sw + 1
    cols = []
    for i in range(kh):
        for j in range(kw):
            cols.append(x[:, i:i + sh * (ho - 1) + 1:sh,
                          j:j + sw * (wo - 1) + 1:sw, :])
    patches = cols[0] if len(cols) == 1 else jnp.concatenate(cols, axis=-1)
    return patches.reshape(n * ho * wo, kh * kw * c), ho, wo


def basic_conv2d(x, p):
    """torchvision BasicConv2d: Conv(no bias) -> BatchNorm(eval) -> ReLU (bf16 out)."""
    m = p.meta
    n, h, w, c = x.shape
    if m["kh"] == 1 and m["kw"] == 1 and m["sh"] == 1 and m["sw"] == 1:
        a = x.reshape(n * h * w, c)           # 1x1: no patch materialization
        ho, wo = h, w
    else:
        # TODO(synk): stride-1 kxk convs still materialize bf16 im2col patches in HBM;
        #             a per-tap grid-axis accumulate kernel would remove this last copy.
        a, ho, wo = _im2col(x.astype(_BF16), m["kh"], m["kw"],
                            m["sh"], m["sw"], m["ph"], m["pw"])
    out = gemm_bn_relu(a, p.w, p.sb, m["n"])
    return out.reshape(n, ho, wo, m["n"])


# TODO(synk): windowed max/sum pooling kept as lax.reduce_window glue (negligible cost
# vs the conv GEMMs, which carry the hot-path compute in Pallas).
def max_pool_3x3_s2(x):
    init = jnp.asarray(-jnp.inf, dtype=x.dtype)
    return lax.reduce_window(x, init, lax.max, (1, 3, 3, 1), (1, 2, 2, 1), "VALID")


def sum_pool_3x3_s1_p1(x):
    # Window SUM in f32 (parity with F.avg_pool2d); the /9 (count_include_pad=True) is
    # folded into the following branch_pool conv's BN scale.
    y = lax.reduce_window(x.astype(_F32), 0.0, lax.add, (1, 3, 3, 1), (1, 1, 1, 1),
                          [(0, 0), (1, 1), (1, 1), (0, 0)])
    return y.astype(_BF16)


def _split_last(x, sizes):
    outs, off = [], 0
    for s in sizes:
        outs.append(x[..., off:off + s])
        off += s
    return outs


# ---------------------------------------------------------------------------
# Parameters (deterministic synthetic; shapes match torchvision Inception3)
# ---------------------------------------------------------------------------
@jax.tree_util.register_pytree_node_class
class ConvParams:
    """Pre-padded GEMM weight (Kp, Np) bf16, packed (scale, bias) (2, Np) f32 and an
    optional center-tap weight (Cin, Np) bf16 (for the fused 1x1-spatial InceptionE),
    with static geometry as pytree aux-data so the whole tree passes through jit."""

    def __init__(self, w, sb, meta, w_center=None):
        self.w = w
        self.sb = sb
        self.meta = meta
        self.w_center = w_center

    def tree_flatten(self):
        return (self.w, self.sb, self.w_center), tuple(sorted(self.meta.items()))

    @classmethod
    def tree_unflatten(cls, aux, children):
        return cls(children[0], children[1], dict(aux), children[2])


class ParamGen:
    def __init__(self, seed):
        self._key = jax.random.PRNGKey(seed)

    def next(self):
        self._key, k = jax.random.split(self._key)
        return k


def _conv_raw(pg, cin, cout, kernel_size, stride=1, padding=0, extra_scale=1.0):
    kh, kw = _pair(kernel_size)
    sh, sw = _pair(stride)
    ph, pw = _pair(padding)
    k_w, k_g, k_b, k_m, k_v = jax.random.split(pg.next(), 5)
    fan_in = cin * kh * kw
    w = jax.random.normal(k_w, (cout, cin, kh, kw), _F32) * jnp.sqrt(2.0 / fan_in)
    gamma = 1.0 + 0.05 * jax.random.normal(k_g, (cout,), _F32)
    beta = 0.05 * jax.random.normal(k_b, (cout,), _F32)
    rmean = 0.05 * jax.random.normal(k_m, (cout,), _F32)
    rvar = 1.0 + 0.1 * jax.random.uniform(k_v, (cout,), _F32)
    scale0 = gamma / jnp.sqrt(rvar + _EPS)
    bias = beta - rmean * scale0
    scale = scale0 * extra_scale              # extra_scale folds e.g. the avg-pool 1/9
    # (Cout, Cin, kh, kw) -> (kh*kw*Cin, Cout) (matches _im2col row order)
    w_gemm = jnp.transpose(w, (2, 3, 1, 0)).reshape(kh * kw * cin, cout)
    return dict(w=w_gemm, scale=scale, bias=bias,
                kh=kh, kw=kw, sh=sh, sw=sw, ph=ph, pw=pw, n=cout, cin=cin)


def _finalize_conv(raw, splits=None, store_center=False):
    K, N = raw["w"].shape
    Kp = _round_up(K, _SUB)                   # 16-aligned only: no 128-wide zero columns
    Np = _round_up(N, _LANE)
    w_p = jnp.pad(raw["w"], ((0, Kp - K), (0, Np - N))).astype(_BF16)
    sb = jnp.pad(jnp.stack([raw["scale"], raw["bias"]]), ((0, 0), (0, Np - N)))
    w_center = None
    if store_center:
        cin = raw["cin"]
        ci = (raw["kh"] // 2) * raw["kw"] + (raw["kw"] // 2)
        wc = raw["w"][ci * cin:(ci + 1) * cin, :]
        w_center = jnp.pad(wc, ((0, 0), (0, Np - N))).astype(_BF16)
    meta = dict(kh=raw["kh"], kw=raw["kw"], sh=raw["sh"], sw=raw["sw"],
                ph=raw["ph"], pw=raw["pw"], k=K, n=N,
                splits=tuple(splits) if splits is not None else None)
    return ConvParams(w_p, sb, meta, w_center)


def basic_conv_params(pg, cin, cout, kernel_size, stride=1, padding=0,
                      extra_scale=1.0, store_center=False):
    return _finalize_conv(_conv_raw(pg, cin, cout, kernel_size, stride, padding,
                                    extra_scale), store_center=store_center)


def fuse_1x1_params(raws):
    """Fuse sibling 1x1 convs reading the same input into one lane-dense GEMM."""
    fused = dict(
        w=jnp.concatenate([r["w"] for r in raws], axis=1),
        scale=jnp.concatenate([r["scale"] for r in raws]),
        bias=jnp.concatenate([r["bias"] for r in raws]),
        kh=1, kw=1, sh=1, sw=1, ph=0, pw=0,
        n=sum(r["n"] for r in raws), cin=raws[0]["cin"])
    return _finalize_conv(fused, splits=[r["n"] for r in raws])


def inception_a_params(pg, cin, pool_features):
    b1 = _conv_raw(pg, cin, 64, 1)
    b5_1 = _conv_raw(pg, cin, 48, 1)
    b5_2 = basic_conv_params(pg, 48, 64, 5, padding=2)
    bd_1 = _conv_raw(pg, cin, 64, 1)
    bd_2 = basic_conv_params(pg, 64, 96, 3, padding=1)
    bd_3 = basic_conv_params(pg, 96, 96, 3, padding=1)
    bp = basic_conv_params(pg, cin, pool_features, 1, extra_scale=1.0 / 9.0)
    return dict(stem=fuse_1x1_params([b1, b5_1, bd_1]),
                branch5x5_2=b5_2, branch3x3dbl_2=bd_2, branch3x3dbl_3=bd_3,
                branch_pool=bp)


def inception_b_params(pg, cin):
    return dict(
        branch3x3=basic_conv_params(pg, cin, 384, 3, stride=2),
        branch3x3dbl_1=basic_conv_params(pg, cin, 64, 1),
        branch3x3dbl_2=basic_conv_params(pg, 64, 96, 3, padding=1),
        branch3x3dbl_3=basic_conv_params(pg, 96, 96, 3, stride=2),
    )


def inception_c_params(pg, cin, c7):
    b1 = _conv_raw(pg, cin, 192, 1)
    b7_1 = _conv_raw(pg, cin, c7, 1)
    b7_2 = basic_conv_params(pg, c7, c7, (1, 7), padding=(0, 3))
    b7_3 = basic_conv_params(pg, c7, 192, (7, 1), padding=(3, 0))
    bd_1 = _conv_raw(pg, cin, c7, 1)
    bd_2 = basic_conv_params(pg, c7, c7, (7, 1), padding=(3, 0))
    bd_3 = basic_conv_params(pg, c7, c7, (1, 7), padding=(0, 3))
    bd_4 = basic_conv_params(pg, c7, c7, (7, 1), padding=(3, 0))
    bd_5 = basic_conv_params(pg, c7, 192, (1, 7), padding=(0, 3))
    bp = basic_conv_params(pg, cin, 192, 1, extra_scale=1.0 / 9.0)
    # TODO(synk): the 7x7/7x7dbl chains run at M=18 and could be fused into one kernel
    #             (intermediates in VMEM) like InceptionE; kept per-conv for safety.
    return dict(stem=fuse_1x1_params([b1, b7_1, bd_1]),
                branch7x7_2=b7_2, branch7x7_3=b7_3,
                branch7x7dbl_2=bd_2, branch7x7dbl_3=bd_3,
                branch7x7dbl_4=bd_4, branch7x7dbl_5=bd_5,
                branch_pool=bp)


def inception_d_params(pg, cin):
    b3_1 = _conv_raw(pg, cin, 192, 1)
    b3_2 = basic_conv_params(pg, 192, 320, 3, stride=2)
    b7_1 = _conv_raw(pg, cin, 192, 1)
    b7_2 = basic_conv_params(pg, 192, 192, (1, 7), padding=(0, 3))
    b7_3 = basic_conv_params(pg, 192, 192, (7, 1), padding=(3, 0))
    b7_4 = basic_conv_params(pg, 192, 192, 3, stride=2)
    return dict(stem=fuse_1x1_params([b3_1, b7_1]),
                branch3x3_2=b3_2,
                branch7x7x3_2=b7_2, branch7x7x3_3=b7_3, branch7x7x3_4=b7_4)


def inception_e_params(pg, cin):
    b1 = _conv_raw(pg, cin, 320, 1)
    b3_1 = _conv_raw(pg, cin, 384, 1)
    b3_2a = basic_conv_params(pg, 384, 384, (1, 3), padding=(0, 1), store_center=True)
    b3_2b = basic_conv_params(pg, 384, 384, (3, 1), padding=(1, 0), store_center=True)
    bd_1 = _conv_raw(pg, cin, 448, 1)
    bd_2 = basic_conv_params(pg, 448, 384, 3, padding=1, store_center=True)
    bd_3a = basic_conv_params(pg, 384, 384, (1, 3), padding=(0, 1), store_center=True)
    bd_3b = basic_conv_params(pg, 384, 384, (3, 1), padding=(1, 0), store_center=True)
    bp = basic_conv_params(pg, cin, 192, 1, extra_scale=1.0 / 9.0)
    return dict(stem=fuse_1x1_params([b1, b3_1, bd_1]),
                branch3x3_2a=b3_2a, branch3x3_2b=b3_2b,
                branch3x3dbl_2=bd_2, branch3x3dbl_3a=bd_3a, branch3x3dbl_3b=bd_3b,
                branch_pool=bp)


def build_inception_v3_params(pg, num_classes):
    # TODO(synk): weights are deterministic synthetic init (no .pth checkpoint load);
    #             AuxLogits is built in PyTorch but never evaluated in eval forward -> omitted.
    P = dict(
        Conv2d_1a_3x3=basic_conv_params(pg, 3, 32, 3, stride=2),
        Conv2d_2a_3x3=basic_conv_params(pg, 32, 32, 3),
        Conv2d_2b_3x3=basic_conv_params(pg, 32, 64, 3, padding=1),
        Conv2d_3b_1x1=basic_conv_params(pg, 64, 80, 1),
        Conv2d_4a_3x3=basic_conv_params(pg, 80, 192, 3),
        Mixed_5b=inception_a_params(pg, 192, 32),
        Mixed_5c=inception_a_params(pg, 256, 64),
        Mixed_5d=inception_a_params(pg, 288, 64),
        Mixed_6a=inception_b_params(pg, 288),
        Mixed_6b=inception_c_params(pg, 768, 128),
        Mixed_6c=inception_c_params(pg, 768, 160),
        Mixed_6d=inception_c_params(pg, 768, 160),
        Mixed_6e=inception_c_params(pg, 768, 192),
        Mixed_7a=inception_d_params(pg, 768),
        Mixed_7b=inception_e_params(pg, 1280),
        Mixed_7c=inception_e_params(pg, 2048),
    )
    bound = 1.0 / math.sqrt(2048.0)           # nn.Linear default init
    kf1, kf2 = jax.random.split(pg.next())
    fc_w = jax.random.uniform(kf1, (2048, num_classes), _F32, -bound, bound)
    fc_b = jax.random.uniform(kf2, (num_classes,), _F32, -bound, bound)
    Np = _round_up(num_classes, _LANE)
    P["fc_w"] = jnp.pad(fc_w, ((0, 0), (0, Np - num_classes))).astype(_BF16)
    # padded class logits get -1e30 bias so they contribute exactly 0 to the softmax
    P["fc_b"] = jnp.pad(fc_b, (0, Np - num_classes), constant_values=-1e30).reshape(1, Np)
    return P


# ---------------------------------------------------------------------------
# Inception blocks (forward)
# ---------------------------------------------------------------------------
def inception_a(x, p):
    stem = basic_conv2d(x, p["stem"])                       # fused [b1 | b5_1 | bd_1]
    b1, b5, bd = _split_last(stem, p["stem"].meta["splits"])
    b5 = basic_conv2d(b5, p["branch5x5_2"])
    bd = basic_conv2d(basic_conv2d(bd, p["branch3x3dbl_2"]), p["branch3x3dbl_3"])
    bp = basic_conv2d(sum_pool_3x3_s1_p1(x), p["branch_pool"])
    return jnp.concatenate([b1, b5, bd, bp], axis=-1)


def inception_b(x, p):
    b3 = basic_conv2d(x, p["branch3x3"])
    bd = basic_conv2d(basic_conv2d(basic_conv2d(
        x, p["branch3x3dbl_1"]), p["branch3x3dbl_2"]), p["branch3x3dbl_3"])
    bp = max_pool_3x3_s2(x)
    return jnp.concatenate([b3, bd, bp], axis=-1)


def inception_c(x, p):
    stem = basic_conv2d(x, p["stem"])                       # fused [b1 | b7_1 | b7dbl_1]
    b1, b7, bd = _split_last(stem, p["stem"].meta["splits"])
    b7 = basic_conv2d(basic_conv2d(b7, p["branch7x7_2"]), p["branch7x7_3"])
    for name in ("branch7x7dbl_2", "branch7x7dbl_3", "branch7x7dbl_4", "branch7x7dbl_5"):
        bd = basic_conv2d(bd, p[name])
    bp = basic_conv2d(sum_pool_3x3_s1_p1(x), p["branch_pool"])
    return jnp.concatenate([b1, b7, bd, bp], axis=-1)


def inception_d(x, p):
    stem = basic_conv2d(x, p["stem"])                       # fused [b3_1 | b7x3_1]
    b3, b7 = _split_last(stem, p["stem"].meta["splits"])
    b3 = basic_conv2d(b3, p["branch3x3_2"])
    for name in ("branch7x7x3_2", "branch7x7x3_3", "branch7x7x3_4"):
        b7 = basic_conv2d(b7, p[name])
    bp = max_pool_3x3_s2(x)
    return jnp.concatenate([b3, b7, bp], axis=-1)


def _inception_e_general(x, p):
    """Fallback InceptionE (spatial > 1): per-conv Pallas GEMMs with full tap weights."""
    stem = basic_conv2d(x, p["stem"])                       # fused [b1 | b3_1 | bd_1]
    b1, b3, bd = _split_last(stem, p["stem"].meta["splits"])
    b3 = jnp.concatenate([basic_conv2d(b3, p["branch3x3_2a"]),
                          basic_conv2d(b3, p["branch3x3_2b"])], axis=-1)
    bd = basic_conv2d(bd, p["branch3x3dbl_2"])
    bd = jnp.concatenate([basic_conv2d(bd, p["branch3x3dbl_3a"]),
                          basic_conv2d(bd, p["branch3x3dbl_3b"])], axis=-1)
    bp = basic_conv2d(sum_pool_3x3_s1_p1(x), p["branch_pool"])
    return jnp.concatenate([b1, b3, bd, bp], axis=-1)


def _inception_e_fused_1x1(x, p):
    """Whole InceptionE block as one Pallas kernel when the feature map is 1x1."""
    n, h, w, cin = x.shape
    a = x.reshape(n, cin).astype(_BF16)
    Mp = _round_up(max(n, _SUB), _SUB)
    if Mp > n:
        a = jnp.pad(a, ((0, Mp - n), (0, 0)))
    st = p["stem"]
    kernel = functools.partial(_inception_e_1x1_kernel,
                               splits=st.meta["splits"],
                               n_pool=p["branch_pool"].meta["n"])
    n_out = 320 + 2 * 384 + 2 * 384 + 192     # = 2048
    out = pl.pallas_call(
        kernel,
        out_shape=jax.ShapeDtypeStruct((Mp, n_out), _BF16),
        compiler_params=pltpu.CompilerParams(vmem_limit_bytes=_VMEM_LIMIT),
    )(a, st.w, st.sb,
      p["branch3x3_2a"].w_center, p["branch3x3_2a"].sb,
      p["branch3x3_2b"].w_center, p["branch3x3_2b"].sb,
      p["branch3x3dbl_2"].w_center, p["branch3x3dbl_2"].sb,
      p["branch3x3dbl_3a"].w_center, p["branch3x3dbl_3a"].sb,
      p["branch3x3dbl_3b"].w_center, p["branch3x3dbl_3b"].sb,
      p["branch_pool"].w, p["branch_pool"].sb)
    return out[:n].reshape(n, 1, 1, n_out)


def inception_e(x, p):
    if x.shape[1] == 1 and x.shape[2] == 1:
        return _inception_e_fused_1x1(x, p)
    return _inception_e_general(x, p)


def inception_v3_forward(params, x_nchw, num_classes):
    """x_nchw: float32 (N, 3, H, W), H,W >= 75. Returns softmax probabilities (N, num_classes)."""
    x = jnp.transpose(x_nchw, (0, 2, 3, 1)).astype(_BF16)   # NCHW -> NHWC, bf16 activations
    x = basic_conv2d(x, params["Conv2d_1a_3x3"])
    x = basic_conv2d(x, params["Conv2d_2a_3x3"])
    x = basic_conv2d(x, params["Conv2d_2b_3x3"])
    x = max_pool_3x3_s2(x)
    x = basic_conv2d(x, params["Conv2d_3b_1x1"])
    x = basic_conv2d(x, params["Conv2d_4a_3x3"])
    x = max_pool_3x3_s2(x)
    x = inception_a(x, params["Mixed_5b"])
    x = inception_a(x, params["Mixed_5c"])
    x = inception_a(x, params["Mixed_5d"])
    x = inception_b(x, params["Mixed_6a"])
    x = inception_c(x, params["Mixed_6b"])
    x = inception_c(x, params["Mixed_6c"])
    x = inception_c(x, params["Mixed_6d"])
    x = inception_c(x, params["Mixed_6e"])
    x = inception_d(x, params["Mixed_7a"])
    x = inception_e(x, params["Mixed_7b"])
    x = inception_e(x, params["Mixed_7c"])
    feat = jnp.mean(x.astype(_F32), axis=(1, 2))   # adaptive avgpool (1,1) + flatten; Dropout no-op
    return fc_softmax(feat, params["fc_w"], params["fc_b"], num_classes)


# ---------------------------------------------------------------------------
if __name__ == "__main__":
    NUM_CLASSES = 10
    pg = ParamGen(42)
    params = build_inception_v3_params(pg, NUM_CLASSES)

    # Smallest spatial size the Inception-V3 trunk supports is 75x75 (batch=2, RGB).
    x = jax.random.normal(jax.random.PRNGKey(0), (2, 3, 75, 75), _F32)

    def _ref_conv(inp, p, cin):
        """XLA reference conv with identical bf16 operands + f32 accumulation."""
        m = p.meta
        w_hwio = p.w[:m["k"], :m["n"]].reshape(m["kh"], m["kw"], cin, m["n"])
        y = lax.conv_general_dilated(
            inp.astype(_BF16), w_hwio, (m["sh"], m["sw"]),
            [(m["ph"], m["ph"]), (m["pw"], m["pw"])],
            dimension_numbers=("NHWC", "HWIO", "NHWC"),
            preferred_element_type=jnp.float32)
        return jnp.maximum(y * p.sb[0, :m["n"]] + p.sb[1, :m["n"]], 0.0)

    x_nhwc = jnp.transpose(x, (0, 2, 3, 1))

    # Sanity-check the im2col GEMM path (3x3 stride-2 first layer, bf16 output).
    p0 = params["Conv2d_1a_3x3"]
    y_pal = basic_conv2d(x_nhwc.astype(_BF16), p0).astype(_F32)
    y_ref = _ref_conv(x_nhwc, p0, 3)
    assert bool(jnp.allclose(y_pal, y_ref, atol=3e-2, rtol=3e-2)), "3x3 conv GEMM mismatch"

    # Sanity-check the fused-1x1 fast path (Mixed_5b stem) on a random feature map.
    p1 = params["Mixed_5b"]["stem"]
    f = jax.random.normal(jax.random.PRNGKey(1), (2, 7, 7, 192), _F32)
    y1_pal = basic_conv2d(f.astype(_BF16), p1).astype(_F32)
    y1_ref = _ref_conv(f, p1, 192)
    assert bool(jnp.allclose(y1_pal, y1_ref, atol=3e-2, rtol=3e-2)), "1x1 conv GEMM mismatch"

    # Sanity-check the fused InceptionE kernel against the per-conv fallback path.
    f7 = jax.random.normal(jax.random.PRNGKey(2), (2, 1, 1, 1280), _F32).astype(_BF16)
    y_fused = _inception_e_fused_1x1(f7, params["Mixed_7b"]).astype(_F32)
    y_gen = _inception_e_general(f7, params["Mixed_7b"]).astype(_F32)
    assert bool(jnp.allclose(y_fused, y_gen, atol=3e-2, rtol=3e-2)), "fused InceptionE mismatch"

    fwd = jax.jit(inception_v3_forward, static_argnums=2)
    probs = jax.block_until_ready(fwd(params, x, NUM_CLASSES))

    assert probs.shape == (2, NUM_CLASSES)
    assert bool(jnp.all(jnp.isfinite(probs)))
    assert bool(jnp.allclose(jnp.sum(probs, axis=1), 1.0, atol=1e-4))
    print("KERNEL_OK")
</pallas_src>

<mosaic_0001>
module attributes {stable_mosaic.version = 11 : i64} {
  func.func @_gemm_bn_relu_kernel(%arg0: i32, %arg1: i32, %arg2: memref<256x32xbf16, #tpu.memory_space<vmem>>, %arg3: memref<32x128xbf16, #tpu.memory_space<vmem>>, %arg4: memref<2x128xf32, #tpu.memory_space<vmem>>, %arg5: memref<256x128xbf16, #tpu.memory_space<vmem>>) attributes {dimension_semantics = [#tpu.dimension_semantics<parallel>, #tpu.dimension_semantics<parallel>], iteration_bounds = array<i64: 11, 1>, scalar_prefetch = 0 : i64, scratch_operands = 0 : i64, tpu.core_type = #tpu.core_type<tc>, window_params = [{transform_indices = @transform_0, window_bounds = array<i64: 256, 32>}, {transform_indices = @transform_1, window_bounds = array<i64: 32, 128>}, {transform_indices = @transform_2, window_bounds = array<i64: 2, 128>}, {transform_indices = @transform_3, window_bounds = array<i64: 256, 128>}]} {
    %c0 = arith.constant 0 : index
    %c0_0 = arith.constant 0 : index
    %0 = vector.load %arg2[%c0, %c0_0] : memref<256x32xbf16, #tpu.memory_space<vmem>>, vector<256x32xbf16>
    %c0_1 = arith.constant 0 : index
    %c0_2 = arith.constant 0 : index
    %1 = vector.load %arg3[%c0_1, %c0_2] : memref<32x128xbf16, #tpu.memory_space<vmem>>, vector<32x128xbf16>
    %cst = arith.constant dense<0.000000e+00> : vector<256x128xf32>
    %2 = tpu.matmul %0, %1, %cst {dimension_numbers = #tpu.dot_dimension_numbers<[1], [0], [0], [1], [0, 0, 1, 1], [], []>} : vector<256x32xbf16>, vector<32x128xbf16>, vector<256x128xf32> -> vector<256x128xf32>
    %c0_3 = arith.constant 0 : index
    %c0_4 = arith.constant 0 : index
    %3 = vector.load %arg4[%c0_3, %c0_4] : memref<2x128xf32, #tpu.memory_space<vmem>>, vector<1x128xf32>
    %4 = vector.broadcast %3 : vector<1x128xf32> to vector<256x128xf32>
    %5 = arith.mulf %2, %4 : vector<256x128xf32>
    %c1 = arith.constant 1 : index
    %c0_5 = arith.constant 0 : index
    %6 = vector.load %arg4[%c1, %c0_5] : memref<2x128xf32, #tpu.memory_space<vmem>>, vector<1x128xf32>
    %7 = vector.broadcast %6 : vector<1x128xf32> to vector<256x128xf32>
    %8 = arith.addf %5, %7 : vector<256x128xf32>
    %cst_6 = arith.constant 0.000000e+00 : f32
    %9 = vector.broadcast %cst_6 : f32 to vector<256x128xf32>
    %10 = arith.maximumf %8, %9 : vector<256x128xf32>
    %11 = arith.truncf %10 : vector<256x128xf32> to vector<256x128xbf16>
    %c0_7 = arith.constant 0 : index
    %c0_8 = arith.constant 0 : index
    %12 = vector.load %arg5[%c0_7, %c0_8] : memref<256x128xbf16, #tpu.memory_space<vmem>>, vector<256x128xbf16>
    tpu.vector_store %arg5[%c0_7, %c0_8], %11 {strides = array<i32>} : memref<256x128xbf16, #tpu.memory_space<vmem>>, vector<256x128xbf16>,
    return
  }
  func.func @transform_0(%arg0: i32, %arg1: i32) -> (i32, i32) {
    %c0_i32 = arith.constant 0 : i32
    %c0_i32_0 = arith.constant 0 : i32
    return %arg0, %c0_i32 : i32, i32
  }
  func.func @transform_1(%arg0: i32, %arg1: i32) -> (i32, i32) {
    %c0_i32 = arith.constant 0 : i32
    %c0_i32_0 = arith.constant 0 : i32
    return %c0_i32, %arg1 : i32, i32
  }
  func.func @transform_2(%arg0: i32, %arg1: i32) -> (i32, i32) {
    %c0_i32 = arith.constant 0 : i32
    %c0_i32_0 = arith.constant 0 : i32
    return %c0_i32, %arg1 : i32, i32
  }
  func.func @transform_3(%arg0: i32, %arg1: i32) -> (i32, i32) {
    %c0_i32 = arith.constant 0 : i32
    return %arg0, %arg1 : i32, i32
  }
}

</mosaic_0001>

<llo_original>
// kernel: tpu_custom_call.1
$region0: #{tpu_custom_call.1}
  #allocation0 [shape = 'u32[]', space=smem, size = 0x4, offset = 0x4, fixed_abs, tag = 'smem constant byte address 0x4 - core index']
  #allocation1 [shape = 'u32[144,128]{1,0:T(1,128)}', space=vmem, size = 0x12000, scoped, tag = 'internal scratch']
  %s0 = inlined_call_operand.vmem [shape: bf16[2816,32], index: 0, kind: input, shape index: {}]
  %s1 = inlined_call_operand.vmem [shape: bf16[32,128], index: 1, kind: input, shape index: {}]
  %s2 = inlined_call_operand.vmem [shape: f32[2,128], index: 2, kind: input, shape index: {}]
  %s3 = inlined_call_operand.hbm [shape: bf16[2816,128], index: 3, kind: output, shape index: {}]
  %s4 = sld [smem:[#allocation0]]
  $region45: #{tpu_custom_call.1} parent=0
    _
  %s6 = ssub.s32 1, %s4
  %s7 = scalar_select 0, %s6, %s4
  $region1: #{tpu_custom_call.1} parent=0
    #allocation2 [shape = 'u8[131072]{0}', space=vmem, size = 0x20000, scoped, tag = 'output window, operand 0']
    #allocation3 [shape = 's32[2]{0}', space=sflag, size = 0x8, scoped, tag = 'scoped memory for tpu_custom_call.1']
    %8 = vsyncpa [#allocation3], 0
    %s9 = scalar_lea.sflag [#allocation3], 1
    %10 = vsyncpa %s9, 0
    loop: start=0, step=1, limit=13
    $region2: #{tpu_custom_call.1} parent=1 // loop_pre_header
      _
    $region3: #{tpu_custom_call.1} parent=1 // loop_header
      %s12 = sphi 0, %s16
      %p13 = scmp.ge.s32.totalorder %s12, 13
      %s19 = sphi 0, %s31
      %s20 = sphi 0, %s27
      %s21 = sphi 0, %s19
      %s22 = sphi 0, %s20
      %s23 = sphi 0, %s21
      %s24 = sphi 0, %s22
      %s34 = sphi 0, %s36
      %s37 = sphi 0, %s34
      %s38 = sphi 0, %s37
      %s54 = sphi 0, %s38
      %s60 = sphi 0, %s62
      %s63 = sphi 0, %s60
      %s64 = sphi 0, %s63
      %s80 = sphi 0, %s64
      %s86 = sphi 0, %s88
      %s89 = sphi 0, %s86
      %s90 = sphi 0, %s89
      %s106 = sphi 0, %s90
      %s114 = sphi 0, %s116
      %s117 = sphi 0, %s114
      %s118 = sphi 0, %s117
      %s134 = sphi 0, %s118
    $region4: #{tpu_custom_call.1} parent=1 // loop_header_branch
      %15 = sbr.rel (%p13) target = $region8
    $region5: #{tpu_custom_call.1} parent=1 // loop_body
      %s17 = ssub.s32 %s12, 1
      %s18 = ssub.s32 %s12, 2
      %s25 = sadd.s32 1, %s20
      %p26 = scmp.ge.s32.totalorder %s25, 1
      %s27 = scalar_select %p26, 0, %s25
      %s28 = sadd.s32 1, %s19
      %s29 = scalar_select %p26, %s28, %s19
      %p30 = scmp.ge.s32.totalorder %s29, 11
      %s31 = scalar_select %p30, 0, %s29
      %s32 = ssub.s32 %s19, %s31
      %p33 = scmp.eq.s32.totalorder %s32, 0
      %s35 = sadd.s32 %s34, 1
      %s36 = scalar_select %p33, %s34, %s35
      %p39 = pneg %p33
      %p40 = scmp.eq.s32.totalorder %s12, 10
      %p41 = por %p39, %p40
      %p42 = scmp.ne.s32.totalorder %s34, %s37
      %p43 = scmp.eq.s32.totalorder %s12, 0
      %p44 = por %p42, %p43
      %p45 = scmp.ne.s32.totalorder %s34, %s37
      %p46 = scmp.eq.s32.totalorder %s17, 10
      %p47 = por %p45, %p46
      %p48 = scmp.ne.s32.totalorder %s37, %s38
      %p49 = scmp.eq.s32.totalorder %s17, 0
      %p50 = por %p48, %p49
      %p51 = scmp.ne.s32.totalorder %s37, %s38
      %p52 = scmp.eq.s32.totalorder %s18, 10
      %p53 = por %p51, %p52
      %p55 = scmp.ne.s32.totalorder %s38, %s54
      %p56 = scmp.eq.s32.totalorder %s18, 0
      %p57 = por %p55, %p56
      %s58 = ssub.s32 %s20, %s27
      %p59 = scmp.eq.s32.totalorder %s58, 0
      %s61 = sadd.s32 %s60, 1
      %s62 = scalar_select %p59, %s60, %s61
      %p65 = pneg %p59
      %p66 = scmp.eq.s32.totalorder %s12, 10
      %p67 = por %p65, %p66
      %p68 = scmp.ne.s32.totalorder %s60, %s63
      %p69 = scmp.eq.s32.totalorder %s12, 0
      %p70 = por %p68, %p69
      %p71 = scmp.ne.s32.totalorder %s60, %s63
      %p72 = scmp.eq.s32.totalorder %s17, 10
      %p73 = por %p71, %p72
      %p74 = scmp.ne.s32.totalorder %s63, %s64
      %p75 = scmp.eq.s32.totalorder %s17, 0
      %p76 = por %p74, %p75
      %p77 = scmp.ne.s32.totalorder %s63, %s64
      %p78 = scmp.eq.s32.totalorder %s18, 10
      %p79 = por %p77, %p78
      %p81 = scmp.ne.s32.totalorder %s64, %s80
      %p82 = scmp.eq.s32.totalorder %s18, 0
      %p83 = por %p81, %p82
      %s84 = ssub.s32 %s20, %s27
      %p85 = scmp.eq.s32.totalorder %s84, 0
      %s87 = sadd.s32 %s86, 1
      %s88 = scalar_select %p85, %s86, %s87
      %p91 = pneg %p85
      %p92 = scmp.eq.s32.totalorder %s12, 10
      %p93 = por %p91, %p92
      %p94 = scmp.ne.s32.totalorder %s86, %s89
      %p95 = scmp.eq.s32.totalorder %s12, 0
      %p96 = por %p94, %p95
      %p97 = scmp.ne.s32.totalorder %s86, %s89
      %p98 = scmp.eq.s32.totalorder %s17, 10
      %p99 = por %p97, %p98
      %p100 = scmp.ne.s32.totalorder %s89, %s90
      %p101 = scmp.eq.s32.totalorder %s17, 0
      %p102 = por %p100, %p101
      %p103 = scmp.ne.s32.totalorder %s89, %s90
      %p104 = scmp.eq.s32.totalorder %s18, 10
      %p105 = por %p103, %p104
      %p107 = scmp.ne.s32.totalorder %s90, %s106
      %p108 = scmp.eq.s32.totalorder %s18, 0
      %p109 = por %p107, %p108
      %s110 = ssub.s32 %s19, %s31
      %s111 = ssub.s32 %s20, %s27
      %s112 = sor.u32 %s110, %s111
      %p113 = scmp.eq.s32.totalorder %s112, 0
      %s115 = sadd.s32 %s114, 1
      %s116 = scalar_select %p113, %s114, %s115
      %p119 = pneg %p113
      %p120 = scmp.eq.s32.totalorder %s12, 10
      %p121 = por %p119, %p120
      %p122 = scmp.ne.s32.totalorder %s114, %s117
      %p123 = scmp.eq.s32.totalorder %s12, 0
      %p124 = por %p122, %p123
      %p125 = scmp.ne.s32.totalorder %s114, %s117
      %p126 = scmp.eq.s32.totalorder %s17, 10
      %p127 = por %p125, %p126
      %p128 = scmp.ne.s32.totalorder %s117, %s118
      %p129 = scmp.eq.s32.totalorder %s17, 0
      %p130 = por %p128, %p129
      %p131 = scmp.ne.s32.totalorder %s117, %s118
      %p132 = scmp.eq.s32.totalorder %s18, 10
      %p133 = por %p131, %p132
      %p135 = scmp.ne.s32.totalorder %s118, %s134
      %p136 = scmp.eq.s32.totalorder %s18, 0
      %p137 = por %p135, %p136
      %p138 = scmp.le.s32.totalorder 1, %s12
      %p139 = scmp.lt.s32.totalorder %s12, 12
      %p140 = pnand %p138, %p139
      %p141 = pneg %p140
      // Predicated region
      $region9: #{tpu_custom_call.1} parent=5 // pred_check
        _
      $region10: #{tpu_custom_call.1} parent=5 // pred_check_branch
        %143 = sbr.rel (%p140) target = $region12
      $region11: #{tpu_custom_call.1} parent=5 // pred_region
        %s144 = ssub.s32 %s12, 1
        // Predicated region
        $region13: #{tpu_custom_call.1} parent=11 // pred_check
          %p145 = pneg %p76
        $region14: #{tpu_custom_call.1} parent=11 // pred_check_branch
          %147 = sbr.rel (%p145) target = $region16
        $region15: #{tpu_custom_call.1} parent=11 // pred_region
          %p148 = scmp.lt.s32.totalorder %s22, 0
          %s149 = scalar_select %p148, %s22, 0
          %s150 = smul.addr %s149, 4
          %s151 = scalar_lea.vmem %s1, %s150
        $region16: #{tpu_custom_call.1} parent=11 // pred_fallthru
          _
        // Predicated region
        $region17: #{tpu_custom_call.1} parent=11 // pred_check
          %p152 = pneg %p102
        $region18: #{tpu_custom_call.1} parent=11 // pred_check_branch
          %154 = sbr.rel (%p152) target = $region20
        $region19: #{tpu_custom_call.1} parent=11 // pred_region
          %p155 = scmp.lt.s32.totalorder %s22, 0
          %s156 = scalar_select %p155, %s22, 0
          %s157 = smul.addr %s156, 2
          %s158 = scalar_lea.vmem %s2, %s157
        $region20: #{tpu_custom_call.1} parent=11 // pred_fallthru
          _
      $region12: #{tpu_custom_call.1} parent=5 // pred_fallthru
        _
      %p159 = scmp.lt.s32.totalorder %s12, 11
      // Predicated region
      $region21: #{tpu_custom_call.1} parent=5 // pred_check
        %p160 = pneg %p159
      $region22: #{tpu_custom_call.1} parent=5 // pred_check_branch
        %162 = sbr.rel (%p160) target = $region24
      $region23: #{tpu_custom_call.1} parent=5 // pred_region
        // Predicated region
        $region25: #{tpu_custom_call.1} parent=23 // pred_check
          %p163 = pneg %p44
        $region26: #{tpu_custom_call.1} parent=23 // pred_check_branch
          %165 = sbr.rel (%p163) target = $region28
        $region27: #{tpu_custom_call.1} parent=23 // pred_region
          %s166 = smul.u32 32, %s19
          %p167 = scmp.lt.s32.totalorder %s166, 351
          %s168 = scalar_select %p167, %s166, 351
          %s169 = smul.addr %s168, 4
          %s170 = scalar_lea.vmem %s0, %s169
          %s171 = smul.u32 32, %s19
        $region28: #{tpu_custom_call.1} parent=23 // pred_fallthru
          _
      $region24: #{tpu_custom_call.1} parent=5 // pred_fallthru
        _
      %p172 = scmp.le.s32.totalorder 1, %s12
      %p173 = scmp.lt.s32.totalorder %s12, 12
      %p174 = pnand %p172, %p173
      %p175 = pneg %p174
      // Predicated region
      $region29: #{tpu_custom_call.1} parent=5 // pred_check
        _
      $region30: #{tpu_custom_call.1} parent=5 // pred_check_branch
        %177 = sbr.rel (%p174) target = $region32
      $region31: #{tpu_custom_call.1} parent=5 // pred_region
        %s178 = ssub.s32 %s12, 1
        %s179 = smul.u32 32, %s21
        %p180 = scmp.lt.s32.totalorder %s179, 351
        %s181 = scalar_select %p180, %s179, 351
        %s182 = smul.addr %s181, 4
        %s183 = scalar_lea.vmem %s0, %s182
        %p184 = pneg %p50
        %p185 = pneg %p47
        %p186 = scmp.lt.s32.totalorder %s22, 0
        %s187 = scalar_select %p186, %s22, 0
        %s188 = smul.addr %s187, 4
        %s189 = scalar_lea.vmem %s1, %s188
        %p190 = pneg %p76
        %p191 = pneg %p73
        %p192 = scmp.lt.s32.totalorder %s22, 0
        %s193 = scalar_select %p192, %s22, 0
        %s194 = smul.addr %s193, 2
        %s195 = scalar_lea.vmem %s2, %s194
        %p196 = pneg %p102
        %p197 = pneg %p99
        %p198 = pneg %p130
        %p199 = pneg %p127
        %s200 = sand.u32 %s117, 1
        %s201 = scalar_lea.sflag [#allocation3], %s200
        %s202 = sand.u32 %s117, 1
        %s203 = smul.addr %s202, 128
        %s204 = scalar_lea.vmem [#allocation2], %s203
        %s205 = smul.u32 32, %s21
        %p206 = scmp.lt.s32.totalorder %s205, 351
        %s207 = scalar_select %p206, %s205, 351
        %s208 = smul.addr %s207, 4
        %s209 = scalar_lea.vmem %s0, %s208
        %s210 = smul.u32 32, %s21
        %p211 = scmp.lt.s32.totalorder %s22, 0
        %s212 = scalar_select %p211, %s22, 0
        %s213 = smul.addr %s212, 4
        %s214 = scalar_lea.vmem %s1, %s213
        %p215 = scmp.lt.s32.totalorder %s22, 0
        %s216 = scalar_select %p215, %s22, 0
        %s217 = smul.addr %s216, 2
        %s218 = scalar_lea.vmem %s2, %s217
        %s219 = smul.u32 32, %s21
        %v221 = vld [vmem:[%s209] sm:$0xf]
        %v222 = vld [vmem:[%s209 + $0x4] sm:$0xf]
        %v223 = vld [vmem:[%s209 + $0x8] sm:$0xf]
        %v224 = vld [vmem:[%s209 + $0xc] sm:$0xf]
        %v225 = vld [vmem:[%s209 + $0x10] sm:$0xf]
        %v226 = vld [vmem:[%s209 + $0x14] sm:$0xf]
        %v227 = vld [vmem:[%s209 + $0x18] sm:$0xf]
        %v228 = vld [vmem:[%s209 + $0x1c] sm:$0xf]
        %v229 = vld [vmem:[%s209 + $0x20] sm:$0xf]
        %v230 = vld [vmem:[%s209 + $0x24] sm:$0xf]
        %v231 = vld [vmem:[%s209 + $0x28] sm:$0xf]
        %v232 = vld [vmem:[%s209 + $0x2c] sm:$0xf]
        %v233 = vld [vmem:[%s209 + $0x30] sm:$0xf]
        %v234 = vld [vmem:[%s209 + $0x34] sm:$0xf]
        %v235 = vld [vmem:[%s209 + $0x38] sm:$0xf]
        %v236 = vld [vmem:[%s209 + $0x3c] sm:$0xf]
        %v237 = vld [vmem:[%s209 + $0x40] sm:$0xf]
        %v238 = vld [vmem:[%s209 + $0x44] sm:$0xf]
        %v239 = vld [vmem:[%s209 + $0x48] sm:$0xf]
        %v240 = vld [vmem:[%s209 + $0x4c] sm:$0xf]
        %v241 = vld [vmem:[%s209 + $0x50] sm:$0xf]
        %v242 = vld [vmem:[%s209 + $0x54] sm:$0xf]
        %v243 = vld [vmem:[%s209 + $0x58] sm:$0xf]
        %v244 = vld [vmem:[%s209 + $0x5c] sm:$0xf]
        %v245 = vld [vmem:[%s209 + $0x60] sm:$0xf]
        %v246 = vld [vmem:[%s209 + $0x64] sm:$0xf]
        %v247 = vld [vmem:[%s209 + $0x68] sm:$0xf]
        %v248 = vld [vmem:[%s209 + $0x6c] sm:$0xf]
        %v249 = vld [vmem:[%s209 + $0x70] sm:$0xf]
        %v250 = vld [vmem:[%s209 + $0x74] sm:$0xf]
        %v251 = vld [vmem:[%s209 + $0x78] sm:$0xf]
        %v252 = vld [vmem:[%s209 + $0x7c] sm:$0xf]
        %v253 = vld [vmem:[%s214] sm:$0xf]
        %v254 = vld [vmem:[%s214 + $0x4] sm:$0xf]
        %v255 = vld [vmem:[%s214 + $0x8] sm:$0xf]
        %v256 = vld [vmem:[%s214 + $0xc] sm:$0xf]
        %v289 = vunpack.c.l.b16 %v221
        %v290 = vunpack.c.l.b16 %v222
        %v291 = vunpack.c.l.b16 %v223
        %v292 = vunpack.c.l.b16 %v224
        %v293 = vunpack.c.l.b16 %v225
        %v294 = vunpack.c.l.b16 %v226
        %v295 = vunpack.c.l.b16 %v227
        %v296 = vunpack.c.l.b16 %v228
        %v297 = vunpack.c.l.b16 %v229
        %v298 = vunpack.c.l.b16 %v230
        %v299 = vunpack.c.l.b16 %v231
        %v300 = vunpack.c.l.b16 %v232
        %v301 = vunpack.c.l.b16 %v233
        %v302 = vunpack.c.l.b16 %v234
        %v303 = vunpack.c.l.b16 %v235
        %v304 = vunpack.c.l.b16 %v236
        %v305 = vunpack.c.l.b16 %v237
        %v306 = vunpack.c.l.b16 %v238
        %v307 = vunpack.c.l.b16 %v239
        %v308 = vunpack.c.l.b16 %v240
        %v309 = vunpack.c.l.b16 %v241
        %v310 = vunpack.c.l.b16 %v242
        %v311 = vunpack.c.l.b16 %v243
        %v312 = vunpack.c.l.b16 %v244
        %v313 = vunpack.c.l.b16 %v245
        %v314 = vunpack.c.l.b16 %v246
        %v315 = vunpack.c.l.b16 %v247
        %v316 = vunpack.c.l.b16 %v248
        %v317 = vunpack.c.l.b16 %v249
        %v318 = vunpack.c.l.b16 %v250
        %v319 = vunpack.c.l.b16 %v251
        %v320 = vunpack.c.l.b16 %v252
        %v321 = vpack.c.b16 %v290, %v289
        %v322 = vpack.c.b16 %v292, %v291
        %v323 = vpack.c.b16 %v294, %v293
        %v324 = vpack.c.b16 %v296, %v295
        %v325 = vpack.c.b16 %v298, %v297
        %v326 = vpack.c.b16 %v300, %v299
        %v327 = vpack.c.b16 %v302, %v301
        %v328 = vpack.c.b16 %v304, %v303
        %v329 = vpack.c.b16 %v306, %v305
        %v330 = vpack.c.b16 %v308, %v307
        %v331 = vpack.c.b16 %v310, %v309
        %v332 = vpack.c.b16 %v312, %v311
        %v333 = vpack.c.b16 %v314, %v313
        %v334 = vpack.c.b16 %v316, %v315
        %v335 = vpack.c.b16 %v318, %v317
        %v336 = vpack.c.b16 %v320, %v319
        %v341 = vunpack.c.l.b16 %v253
        %v342 = vunpack.c.l.b16 %v254
        %v343 = vunpack.c.l.b16 %v255
        %v344 = vunpack.c.l.b16 %v256
        %v345 = vpack.c.b16 %v342, %v341
        %v346 = vpack.c.b16 %v344, %v343
        %vm349 = vcmask 261120
        %v351 = vsel %vm349, %v321, 0
        %v354 = vsel %vm349, %v322, 0
        %v357 = vsel %vm349, %v323, 0
        %v360 = vsel %vm349, %v324, 0
        %v363 = vsel %vm349, %v325, 0
        %v366 = vsel %vm349, %v326, 0
        %v369 = vsel %vm349, %v327, 0
        %v372 = vsel %vm349, %v328, 0
        %v375 = vsel %vm349, %v329, 0
        %v378 = vsel %vm349, %v330, 0
        %v381 = vsel %vm349, %v331, 0
        %v384 = vsel %vm349, %v332, 0
        %v387 = vsel %vm349, %v333, 0
        %v390 = vsel %vm349, %v334, 0
        %v393 = vsel %vm349, %v335, 0
        %v396 = vsel %vm349, %v336, 0
        %398 = vmatprep.subr.bf16.mxu0 0
        %399 = vmatpush1.bf16.msra.mxu0 0
        %400 = vmatprep.subr.bf16.mxu0 0
        %401 = vmatpush1.bf16.msra.mxu0 0
        %402 = vmatprep.subr.bf16.mxu0 0
        %403 = vmatpush1.bf16.msra.mxu0 0
        %404 = vmatprep.subr.bf16.mxu0 0
        %405 = vmatpush1.bf16.msra.mxu0 0
        %406 = vmatprep.subr.bf16.mxu0 0
        %407 = vmatpush1.bf16.msra.mxu0 0
        %408 = vmatprep.subr.bf16.mxu0 0
        %409 = vmatpush1.bf16.msra.mxu0 0
        %410 = vmatprep.subr.bf16.mxu0 0
        %411 = vmatpush1.bf16.msra.mxu0 %v346
        %412 = vmatprep.subr.bf16.mxu0 0
        %413 = vmatpush1.bf16.msra.mxu0 %v345
        %414 = vmatprep.subr.bf16.mxu0 0
        %415 = vmatpush2.bf16.msra.mxu0 0
        %416 = vmatprep.subr.bf16.mxu0 0
        %417 = vmatpush2.bf16.msra.mxu0 0
        %418 = vmatprep.subr.bf16.mxu0 0
        %419 = vmatpush2.bf16.msra.mxu0 0
        %420 = vmatprep.subr.bf16.mxu0 0
        %421 = vmatpush2.bf16.msra.mxu0 0
        %422 = vmatprep.subr.bf16.mxu0 0
        %423 = vmatpush2.bf16.msra.mxu0 0
        %424 = vmatprep.subr.bf16.mxu0 0
        %425 = vmatpush2.bf16.msra.mxu0 0
        %426 = vmatprep.subr.bf16.mxu0 0
        %427 = vmatpush2.bf16.msra.mxu0 0
        %428 = vmatprep.subr.bf16.mxu0 0
        %429 = vmatpush2.bf16.msra.mxu0 0
        %430 = vmatprep.mubr.bf16.mxu0 0
        %431 = vmatmul.mubr.bf16.gmra.mxu0 %v351
        %v432 = vpop.f32.mrf.mxu0
        %v433 = vadd.f32 0.0, %v432
        %v434 = vpop.f32.mrf.mxu0
        %v435 = vpop.f32.mrf.mxu0
        %v436 = vadd.f32 0.0, %v435
        %v437 = vpop.f32.mrf.mxu0
        %438 = vmatprep.mubr.bf16.mxu0 0
        %439 = vmatmul.mubr.bf16.gmra.mxu0 %v354
        %v440 = vpop.f32.mrf.mxu0
        %v441 = vadd.f32 0.0, %v440
        %v442 = vpop.f32.mrf.mxu0
        %v443 = vpop.f32.mrf.mxu0
        %v444 = vadd.f32 0.0, %v443
        %v445 = vpop.f32.mrf.mxu0
        %446 = vmatprep.mubr.bf16.mxu0 0
        %447 = vmatmul.mubr.bf16.gmra.mxu0 %v357
        %v448 = vpop.f32.mrf.mxu0
        %v449 = vadd.f32 0.0, %v448
        %v450 = vpop.f32.mrf.mxu0
        %v451 = vpop.f32.mrf.mxu0
        %v452 = vadd.f32 0.0, %v451
        %v453 = vpop.f32.mrf.mxu0
        %454 = vmatprep.mubr.bf16.mxu0 0
        %455 = vmatmul.mubr.bf16.gmra.mxu0 %v360
        %v456 = vpop.f32.mrf.mxu0
        %v457 = vadd.f32 0.0, %v456
        %v458 = vpop.f32.mrf.mxu0
        %v459 = vpop.f32.mrf.mxu0
        %v460 = vadd.f32 0.0, %v459
        %v461 = vpop.f32.mrf.mxu0
        %462 = vmatprep.mubr.bf16.mxu0 0
        %463 = vmatmul.mubr.bf16.gmra.mxu0 %v363
        %v464 = vpop.f32.mrf.mxu0
        %v465 = vadd.f32 0.0, %v464
        %v466 = vpop.f32.mrf.mxu0
        %v467 = vpop.f32.mrf.mxu0
        %v468 = vadd.f32 0.0, %v467
        %v469 = vpop.f32.mrf.mxu0
        %470 = vmatprep.mubr.bf16.mxu0 0
        %471 = vmatmul.mubr.bf16.gmra.mxu0 %v366
        %v472 = vpop.f32.mrf.mxu0
        %v473 = vadd.f32 0.0, %v472
        %v474 = vpop.f32.mrf.mxu0
        %v475 = vpop.f32.mrf.mxu0
        %v476 = vadd.f32 0.0, %v475
        %v477 = vpop.f32.mrf.mxu0
        %478 = vmatprep.mubr.bf16.mxu0 0
        %479 = vmatmul.mubr.bf16.gmra.mxu0 %v369
        %v480 = vpop.f32.mrf.mxu0
        %v481 = vadd.f32 0.0, %v480
        %v482 = vpop.f32.mrf.mxu0
        %v483 = vpop.f32.mrf.mxu0
        %v484 = vadd.f32 0.0, %v483
        %v485 = vpop.f32.mrf.mxu0
        %486 = vmatprep.mubr.bf16.mxu0 0
        %487 = vmatmul.mubr.bf16.gmra.mxu0 %v372
        %v488 = vpop.f32.mrf.mxu0
        %v489 = vadd.f32 0.0, %v488
        %v490 = vpop.f32.mrf.mxu0
        %v491 = vpop.f32.mrf.mxu0
        %v492 = vadd.f32 0.0, %v491
        %v493 = vpop.f32.mrf.mxu0
        %494 = vmatprep.mubr.bf16.mxu0 0
        %495 = vmatmul.mubr.bf16.gmra.mxu0 %v375
        %v496 = vpop.f32.mrf.mxu0
        %v497 = vadd.f32 0.0, %v496
        %v498 = vpop.f32.mrf.mxu0
        %v499 = vpop.f32.mrf.mxu0
        %v500 = vadd.f32 0.0, %v499
        %v501 = vpop.f32.mrf.mxu0
        %502 = vmatprep.mubr.bf16.mxu0 0
        %503 = vmatmul.mubr.bf16.gmra.mxu0 %v378
        %v504 = vpop.f32.mrf.mxu0
        %v505 = vadd.f32 0.0, %v504
        %v506 = vpop.f32.mrf.mxu0
        %v507 = vpop.f32.mrf.mxu0
        %v508 = vadd.f32 0.0, %v507
        %v509 = vpop.f32.mrf.mxu0
        %510 = vmatprep.mubr.bf16.mxu0 0
        %511 = vmatmul.mubr.bf16.gmra.mxu0 %v381
        %v512 = vpop.f32.mrf.mxu0
        %v513 = vadd.f32 0.0, %v512
        %v514 = vpop.f32.mrf.mxu0
        %v515 = vpop.f32.mrf.mxu0
        %v516 = vadd.f32 0.0, %v515
        %v517 = vpop.f32.mrf.mxu0
        %518 = vmatprep.mubr.bf16.mxu0 0
        %519 = vmatmul.mubr.bf16.gmra.mxu0 %v384
        %v520 = vpop.f32.mrf.mxu0
        %v521 = vadd.f32 0.0, %v520
        %v522 = vpop.f32.mrf.mxu0
        %v523 = vpop.f32.mrf.mxu0
        %v524 = vadd.f32 0.0, %v523
        %v525 = vpop.f32.mrf.mxu0
        %526 = vmatprep.mubr.bf16.mxu0 0
        %527 = vmatmul.mubr.bf16.gmra.mxu0 %v387
        %v528 = vpop.f32.mrf.mxu0
        %v529 = vadd.f32 0.0, %v528
        %v530 = vpop.f32.mrf.mxu0
        %v531 = vpop.f32.mrf.mxu0
        %v532 = vadd.f32 0.0, %v531
        %v533 = vpop.f32.mrf.mxu0
        %534 = vmatprep.mubr.bf16.mxu0 0
        %535 = vmatmul.mubr.bf16.gmra.mxu0 %v390
        %v536 = vpop.f32.mrf.mxu0
        %v537 = vadd.f32 0.0, %v536
        %v538 = vpop.f32.mrf.mxu0
        %v539 = vpop.f32.mrf.mxu0
        %v540 = vadd.f32 0.0, %v539
        %v541 = vpop.f32.mrf.mxu0
        %542 = vmatprep.mubr.bf16.mxu0 0
        %543 = vmatmul.mubr.bf16.gmra.mxu0 %v393
        %v544 = vpop.f32.mrf.mxu0
        %v545 = vadd.f32 0.0, %v544
        %v546 = vpop.f32.mrf.mxu0
        %v547 = vpop.f32.mrf.mxu0
        %v548 = vadd.f32 0.0, %v547
        %v549 = vpop.f32.mrf.mxu0
        %550 = vmatprep.mubr.bf16.mxu0 0
        %551 = vmatmul.mubr.bf16.gmra.mxu0 %v396
        %v552 = vpop.f32.mrf.mxu0
        %v553 = vadd.f32 0.0, %v552
        %v554 = vpop.f32.mrf.mxu0
        %v555 = vpop.f32.mrf.mxu0
        %v556 = vadd.f32 0.0, %v555
        %v557 = vpop.f32.mrf.mxu0
        %558 = vdwg.mxu0
        %v559 = vld [vmem:[%s218] sm:$0x1]
        %v560 = vlaneseq
        %v561 = vshrl.u32 %v560, 7
        %v562 = vsub.s32 0, %v561
        %v563 = vrot.slane %v559, %v562
        %v564 = vmul.f32 %v433, %v563
        %v565 = vmul.f32 %v436, %v563
        %v566 = vmul.f32 %v441, %v563
        %v567 = vmul.f32 %v444, %v563
        %v568 = vmul.f32 %v449, %v563
        %v569 = vmul.f32 %v452, %v563
        %v570 = vmul.f32 %v457, %v563
        %v571 = vmul.f32 %v460, %v563
        %v572 = vmul.f32 %v465, %v563
        %v573 = vmul.f32 %v468, %v563
        %v574 = vmul.f32 %v473, %v563
        %v575 = vmul.f32 %v476, %v563
        %v576 = vmul.f32 %v481, %v563
        %v577 = vmul.f32 %v484, %v563
        %v578 = vmul.f32 %v489, %v563
        %v579 = vmul.f32 %v492, %v563
        %v580 = vmul.f32 %v497, %v563
        %v581 = vmul.f32 %v500, %v563
        %v582 = vmul.f32 %v505, %v563
        %v583 = vmul.f32 %v508, %v563
        %v584 = vmul.f32 %v513, %v563
        %v585 = vmul.f32 %v516, %v563
        %v586 = vmul.f32 %v521, %v563
        %v587 = vmul.f32 %v524, %v563
        %v588 = vmul.f32 %v529, %v563
        %v589 = vmul.f32 %v532, %v563
        %v590 = vmul.f32 %v537, %v563
        %v591 = vmul.f32 %v540, %v563
        %v592 = vmul.f32 %v545, %v563
        %v593 = vmul.f32 %v548, %v563
        %v594 = vmul.f32 %v553, %v563
        %v595 = vmul.f32 %v556, %v563
        %v596 = vld [vmem:[%s218 + $0x1] sm:$0x1]
        %v597 = vlaneseq
        %v598 = vshrl.u32 %v597, 7
        %v599 = vsub.s32 0, %v598
        %v600 = vrot.slane %v596, %v599
        %v601 = vadd.f32 %v564, %v600
        %v602 = vadd.f32 %v565, %v600
        %v603 = vadd.f32 %v566, %v600
        %v604 = vadd.f32 %v567, %v600
        %v605 = vadd.f32 %v568, %v600
        %v606 = vadd.f32 %v569, %v600
        %v607 = vadd.f32 %v570, %v600
        %v608 = vadd.f32 %v571, %v600
        %v609 = vadd.f32 %v572, %v600
        %v610 = vadd.f32 %v573, %v600
        %v611 = vadd.f32 %v574, %v600
        %v612 = vadd.f32 %v575, %v600
        %v613 = vadd.f32 %v576, %v600
        %v614 = vadd.f32 %v577, %v600
        %v615 = vadd.f32 %v578, %v600
        %v616 = vadd.f32 %v579, %v600
        %v617 = vadd.f32 %v580, %v600
        %v618 = vadd.f32 %v581, %v600
        %v619 = vadd.f32 %v582, %v600
        %v620 = vadd.f32 %v583, %v600
        %v621 = vadd.f32 %v584, %v600
        %v622 = vadd.f32 %v585, %v600
        %v623 = vadd.f32 %v586, %v600
        %v624 = vadd.f32 %v587, %v600
        %v625 = vadd.f32 %v588, %v600
        %v626 = vadd.f32 %v589, %v600
        %v627 = vadd.f32 %v590, %v600
        %v628 = vadd.f32 %v591, %v600
        %v629 = vadd.f32 %v592, %v600
        %v630 = vadd.f32 %v593, %v600
        %v631 = vadd.f32 %v594, %v600
        %v632 = vadd.f32 %v595, %v600
        %v633 = vmax.f32 %v601, 0.0
        %v634 = vmax.f32 %v602, 0.0
        %v635 = vmax.f32 %v603, 0.0
        %v636 = vmax.f32 %v604, 0.0
        %v637 = vmax.f32 %v605, 0.0
        %v638 = vmax.f32 %v606, 0.0
        %v639 = vmax.f32 %v607, 0.0
        %v640 = vmax.f32 %v608, 0.0
        %v641 = vmax.f32 %v609, 0.0
        %v642 = vmax.f32 %v610, 0.0
        %v643 = vmax.f32 %v611, 0.0
        %v644 = vmax.f32 %v612, 0.0
        %v645 = vmax.f32 %v613, 0.0
        %v646 = vmax.f32 %v614, 0.0
        %v647 = vmax.f32 %v615, 0.0
        %v648 = vmax.f32 %v616, 0.0
        %v649 = vmax.f32 %v617, 0.0
        %v650 = vmax.f32 %v618, 0.0
        %v651 = vmax.f32 %v619, 0.0
        %v652 = vmax.f32 %v620, 0.0
        %v653 = vmax.f32 %v621, 0.0
        %v654 = vmax.f32 %v622, 0.0
        %v655 = vmax.f32 %v623, 0.0
        %v656 = vmax.f32 %v624, 0.0
        %v657 = vmax.f32 %v625, 0.0
        %v658 = vmax.f32 %v626, 0.0
        %v659 = vmax.f32 %v627, 0.0
        %v660 = vmax.f32 %v628, 0.0
        %v661 = vmax.f32 %v629, 0.0
        %v662 = vmax.f32 %v630, 0.0
        %v663 = vmax.f32 %v631, 0.0
        %v664 = vmax.f32 %v632, 0.0
        %v665 = vpack.c.bf16 %v634, %v633
        %v666 = vpack.c.bf16 %v636, %v635
        %v667 = vpack.c.bf16 %v638, %v637
        %v668 = vpack.c.bf16 %v640, %v639
        %v669 = vpack.c.bf16 %v642, %v641
        %v670 = vpack.c.bf16 %v644, %v643
        %v671 = vpack.c.bf16 %v646, %v645
        %v672 = vpack.c.bf16 %v648, %v647
        %v673 = vpack.c.bf16 %v650, %v649
        %v674 = vpack.c.bf16 %v652, %v651
        %v675 = vpack.c.bf16 %v654, %v653
        %v676 = vpack.c.bf16 %v656, %v655
        %v677 = vpack.c.bf16 %v658, %v657
        %v678 = vpack.c.bf16 %v660, %v659
        %v679 = vpack.c.bf16 %v662, %v661
        %v680 = vpack.c.bf16 %v664, %v663
        %v697 = vunpack.c.l.b16 %v665
        %v698 = vunpack.c.h.b16 %v665
        %v699 = vunpack.c.l.b16 %v666
        %v700 = vunpack.c.h.b16 %v666
        %v701 = vunpack.c.l.b16 %v667
        %v702 = vunpack.c.h.b16 %v667
        %v703 = vunpack.c.l.b16 %v668
        %v704 = vunpack.c.h.b16 %v668
        %v705 = vunpack.c.l.b16 %v669
        %v706 = vunpack.c.h.b16 %v669
        %v707 = vunpack.c.l.b16 %v670
        %v708 = vunpack.c.h.b16 %v670
        %v709 = vunpack.c.l.b16 %v671
        %v710 = vunpack.c.h.b16 %v671
        %v711 = vunpack.c.l.b16 %v672
        %v712 = vunpack.c.h.b16 %v672
        %v713 = vunpack.c.l.b16 %v673
        %v714 = vunpack.c.h.b16 %v673
        %v715 = vunpack.c.l.b16 %v674
        %v716 = vunpack.c.h.b16 %v674
        %v717 = vunpack.c.l.b16 %v675
        %v718 = vunpack.c.h.b16 %v675
        %v719 = vunpack.c.l.b16 %v676
        %v720 = vunpack.c.h.b16 %v676
        %v721 = vunpack.c.l.b16 %v677
        %v722 = vunpack.c.h.b16 %v677
        %v723 = vunpack.c.l.b16 %v678
        %v724 = vunpack.c.h.b16 %v678
        %v725 = vunpack.c.l.b16 %v679
        %v726 = vunpack.c.h.b16 %v679
        %v727 = vunpack.c.l.b16 %v680
        %v728 = vunpack.c.h.b16 %v680
        %v729 = vpack.c.b16 %v697, %v697
        %v730 = vpack.c.b16 %v698, %v698
        %v731 = vpack.c.b16 %v699, %v699
        %v732 = vpack.c.b16 %v700, %v700
        %v733 = vpack.c.b16 %v701, %v701
        %v734 = vpack.c.b16 %v702, %v702
        %v735 = vpack.c.b16 %v703, %v703
        %v736 = vpack.c.b16 %v704, %v704
        %v737 = vpack.c.b16 %v705, %v705
        %v738 = vpack.c.b16 %v706, %v706
        %v739 = vpack.c.b16 %v707, %v707
        %v740 = vpack.c.b16 %v708, %v708
        %v741 = vpack.c.b16 %v709, %v709
        %v742 = vpack.c.b16 %v710, %v710
        %v743 = vpack.c.b16 %v711, %v711
        %v744 = vpack.c.b16 %v712, %v712
        %v745 = vpack.c.b16 %v713, %v713
        %v746 = vpack.c.b16 %v714, %v714
        %v747 = vpack.c.b16 %v715, %v715
        %v748 = vpack.c.b16 %v716, %v716
        %v749 = vpack.c.b16 %v717, %v717
        %v750 = vpack.c.b16 %v718, %v718
        %v751 = vpack.c.b16 %v719, %v719
        %v752 = vpack.c.b16 %v720, %v720
        %v753 = vpack.c.b16 %v721, %v721
        %v754 = vpack.c.b16 %v722, %v722
        %v755 = vpack.c.b16 %v723, %v723
        %v756 = vpack.c.b16 %v724, %v724
        %v757 = vpack.c.b16 %v725, %v725
        %v758 = vpack.c.b16 %v726, %v726
        %v759 = vpack.c.b16 %v727, %v727
        %v760 = vpack.c.b16 %v728, %v728
        %793 = vst [vmem:[%s204] sm:$0xf] %v729
        %794 = vst [vmem:[%s204 + $0x4] sm:$0xf] %v730
        %795 = vst [vmem:[%s204 + $0x8] sm:$0xf] %v731
        %796 = vst [vmem:[%s204 + $0xc] sm:$0xf] %v732
        %797 = vst [vmem:[%s204 + $0x10] sm:$0xf] %v733
        %798 = vst [vmem:[%s204 + $0x14] sm:$0xf] %v734
        %799 = vst [vmem:[%s204 + $0x18] sm:$0xf] %v735
        %800 = vst [vmem:[%s204 + $0x1c] sm:$0xf] %v736
        %801 = vst [vmem:[%s204 + $0x20] sm:$0xf] %v737
        %802 = vst [vmem:[%s204 + $0x24] sm:$0xf] %v738
        %803 = vst [vmem:[%s204 + $0x28] sm:$0xf] %v739
        %804 = vst [vmem:[%s204 + $0x2c] sm:$0xf] %v740
        %805 = vst [vmem:[%s204 + $0x30] sm:$0xf] %v741
        %806 = vst [vmem:[%s204 + $0x34] sm:$0xf] %v742
        %807 = vst [vmem:[%s204 + $0x38] sm:$0xf] %v743
        %808 = vst [vmem:[%s204 + $0x3c] sm:$0xf] %v744
        %809 = vst [vmem:[%s204 + $0x40] sm:$0xf] %v745
        %810 = vst [vmem:[%s204 + $0x44] sm:$0xf] %v746
        %811 = vst [vmem:[%s204 + $0x48] sm:$0xf] %v747
        %812 = vst [vmem:[%s204 + $0x4c] sm:$0xf] %v748
        %813 = vst [vmem:[%s204 + $0x50] sm:$0xf] %v749
        %814 = vst [vmem:[%s204 + $0x54] sm:$0xf] %v750
        %815 = vst [vmem:[%s204 + $0x58] sm:$0xf] %v751
        %816 = vst [vmem:[%s204 + $0x5c] sm:$0xf] %v752
        %817 = vst [vmem:[%s204 + $0x60] sm:$0xf] %v753
        %818 = vst [vmem:[%s204 + $0x64] sm:$0xf] %v754
        %819 = vst [vmem:[%s204 + $0x68] sm:$0xf] %v755
        %820 = vst [vmem:[%s204 + $0x6c] sm:$0xf] %v756
        %821 = vst [vmem:[%s204 + $0x70] sm:$0xf] %v757
        %822 = vst [vmem:[%s204 + $0x74] sm:$0xf] %v758
        %823 = vst [vmem:[%s204 + $0x78] sm:$0xf] %v759
        %824 = vst [vmem:[%s204 + $0x7c] sm:$0xf] %v760
        %s825 = sand.u32 %s117, 1
        %s826 = scalar_lea.sflag [#allocation3], %s825
        %s827 = sand.u32 %s117, 1
        %s828 = smul.addr %s827, 128
        %s829 = scalar_lea.vmem [#allocation2], %s828
        // Predicated region
        $region33: #{tpu_custom_call.1} parent=31 // pred_check
          %p830 = pneg %p127
        $region34: #{tpu_custom_call.1} parent=31 // pred_check_branch
          %832 = sbr.rel (%p830) target = $region36
        $region35: #{tpu_custom_call.1} parent=31 // pred_region
          %s833 = smul.u32 32, %s21
          %s835 = ssub.s32 2048, 2048
          %836 = vsyncadd %s826, %s835
          %s837 = sadd.s32 %s22, %s833
          %s838 = smul.addr %s837, 64
          %s839 = scalar_lea.hbm %s3, %s838
          %s840 = sshll.u32 %s829, 4
          %s841 = int_to_ptr.vmem [resolvable:$true] %s840
          %846 = dma.vmem_to_hbm [thread:$0]  %s841, 2048, %s839, %s826, 64, 64, 4
        $region36: #{tpu_custom_call.1} parent=31 // pred_fallthru
          _
      $region32: #{tpu_custom_call.1} parent=5 // pred_fallthru
        _
      %p847 = scmp.le.s32.totalorder 2, %s12
      // Predicated region
      $region37: #{tpu_custom_call.1} parent=5 // pred_check
        %p848 = pneg %p847
      $region38: #{tpu_custom_call.1} parent=5 // pred_check_branch
        %850 = sbr.rel (%p848) target = $region40
      $region39: #{tpu_custom_call.1} parent=5 // pred_region
        %s851 = ssub.s32 %s12, 2
        // Predicated region
        $region41: #{tpu_custom_call.1} parent=39 // pred_check
          %p852 = pneg %p133
        $region42: #{tpu_custom_call.1} parent=39 // pred_check_branch
          %854 = sbr.rel (%p852) target = $region44
        $region43: #{tpu_custom_call.1} parent=39 // pred_region
          %s855 = sand.u32 %s118, 1
          %s856 = scalar_lea.sflag [#allocation3], %s855
          %s857 = sand.u32 %s118, 1
          %s858 = smul.addr %s857, 128
          %s859 = scalar_lea.vmem [#allocation2], %s858
          %860 = dma.done %s856, 2048
        $region44: #{tpu_custom_call.1} parent=39 // pred_fallthru
          _
      $region40: #{tpu_custom_call.1} parent=5 // pred_fallthru
        _
    $region6: #{tpu_custom_call.1} parent=1 // loop_footer
      %s16 = sadd.s32 1, %s12
    $region7: #{tpu_custom_call.1} parent=1 // loop_footer_branch
      %11 = sbr.rel target = $region3
    $region8: #{tpu_custom_call.1} parent=1 // loop_exit
      _
    %861 = vsyncpa [#allocation3], 1
    %s862 = scalar_lea.sflag [#allocation3], 1
    %863 = vsyncpa %s862, 1

</llo_original>
